<compile_context>
chip_gen: v5e
topology: v5e:2x2
jax: 0.10.0
libtpu: 0.0.40
codegen_flags: <defaults>
</compile_context>

<pallas_src>
import functools

import jax
import jax.numpy as jnp
from jax.experimental import pallas as pl
from jax.experimental.pallas import tpu as pltpu


# --------------------------------------------------------------------------------------
# Kernels
# --------------------------------------------------------------------------------------
def _params_kernel(cond_ref, w_ref, b_ref, s_ref, off_ref, logdet_ref, *,
                   num_features, hw_total):
    """Single-step kernel: nnet matmul + double sigmoid gate + offset + logdet."""
    C = num_features
    f = jnp.dot(cond_ref[...].astype(jnp.float32), w_ref[...].astype(jnp.float32),
                preferred_element_type=jnp.float32) + b_ref[...].astype(jnp.float32)
    t = f[:, :C]
    s = f[:, C:]
    s = jax.nn.sigmoid(s) * 0.98 + 0.01
    s = jax.nn.sigmoid(s) * 0.98 + 0.01            # double application, matches reference
    s_ref[...] = s.astype(s_ref.dtype)
    off_ref[...] = (t * (1.0 - s)).astype(off_ref.dtype)
    # logdet over the expanded log(s) == H*W * per-channel sum (always f32)
    logdet_ref[...] = jnp.sum(jnp.log(s), axis=1, keepdims=True) * jnp.float32(hw_total)


def _affine_kernel(s_ref, off_ref, x_ref, y_ref):
    """Mem-bound streaming body: y = x * s + off, s/off broadcast over the lane (HW) axis."""
    y_ref[...] = (x_ref[...] * s_ref[...] + off_ref[...]).astype(y_ref.dtype)


# --------------------------------------------------------------------------------------
# Tiling / VMEM heuristics
# --------------------------------------------------------------------------------------
def _round_up(a, m):
    return ((a + m - 1) // m) * m


def _vmem_budget_bytes():
    """Generation-aware scoped-VMEM budget (leave headroom under physical capacity)."""
    cap = 64 * 1024 * 1024           # conservative fallback (valid on every generation)
    try:
        cap = int(pltpu.get_tpu_info().vmem_capacity_bytes)
    except Exception:
        pass
    return int(max(32 * 1024 * 1024, min(cap - 16 * 1024 * 1024, 96 * 1024 * 1024)))


def _select_tiles(rows, hw, itemsize, budget_bytes):
    """Pick (row_tile, hw_tile) for an (rows, hw) streaming affine.

    Targets ~8 MiB per x block (double-buffered x+y -> ~4x that in VMEM), keeps the row
    tile a multiple of 8 (or full) and the hw tile a multiple of 128 (or full), and makes
    sure the (fully parallel) grid has >=2 steps when the problem allows it (v7x megacore).
    """
    target = min(8 * 1024 * 1024, max(512 * 1024, budget_bytes // 5))
    row_g = min(rows, 8)
    slab_bytes = row_g * hw * itemsize
    if slab_bytes <= target:
        thw = hw                                           # full HW per block (lane dense)
        tr = row_g * max(1, int(target // slab_bytes))
        tr = min(tr, _round_up(rows, row_g))
    else:
        tr = row_g
        thw = max(128, (int(target // (row_g * itemsize)) // 128) * 128)
        thw = min(thw, _round_up(hw, 128))

    # Guarantee >=2 grid steps on the parallel grid when possible (both TCs get work on v7x).
    if pl.cdiv(rows, tr) * pl.cdiv(hw, thw) == 1:
        if rows > row_g:
            tr = _round_up(pl.cdiv(rows, 2), row_g)
        elif hw > 128:
            thw = max(128, ((_round_up(hw, 128) // 2) // 128) * 128)
    return tr, thw


# --------------------------------------------------------------------------------------
# Forward wrapper
# --------------------------------------------------------------------------------------
def conditional_affine_forward(x, cond, w, b, *, logp=None, row_tile=None, hw_tile=None):
    """Forward pass of ConditionalAffineNd (2D). x: (B, C, H, W); cond: (B, D) or (B, D, H, W)."""
    B, C, H, W = x.shape
    if cond.ndim == 4:
        cond = cond[:, :, 0, 0]                    # matches the PyTorch cond[:, :, 0, 0]
    cond = cond.reshape(B, -1)
    D = cond.shape[1]
    HW = H * W
    rows = B * C

    x_item = jnp.dtype(x.dtype).itemsize
    # bf16/f16 fast path: keep the streaming multiply in x's dtype; logdet math stays f32.
    if x.dtype in (jnp.dtype(jnp.bfloat16), jnp.dtype(jnp.float16)):
        param_dtype = x.dtype
    else:
        param_dtype = jnp.float32
    p_item = jnp.dtype(param_dtype).itemsize

    # ---- kernel 1: per-(batch, channel) params + logdet (tiny, single grid step) ---------
    params_cost = pl.CostEstimate(
        flops=2 * B * D * (2 * C) + 8 * B * C,
        transcendentals=3 * B * C,                 # 2 sigmoids + 1 log on (B, C)
        bytes_accessed=(B * D + D * 2 * C + 2 * C + B) * 4 + 2 * B * C * p_item,
    )
    s_bc, off_bc, logdet = pl.pallas_call(
        functools.partial(_params_kernel, num_features=C, hw_total=HW),
        out_shape=(
            jax.ShapeDtypeStruct((B, C), param_dtype),     # s  (after double gate)
            jax.ShapeDtypeStruct((B, C), param_dtype),     # off = t * (1 - s)
            jax.ShapeDtypeStruct((B, 1), jnp.float32),     # logdet
        ),
        grid_spec=pltpu.PrefetchScalarGridSpec(
            num_scalar_prefetch=0,
            grid=(1,),
            in_specs=[
                pl.BlockSpec((B, D), lambda i: (0, 0)),
                pl.BlockSpec((D, 2 * C), lambda i: (0, 0)),
                pl.BlockSpec((1, 2 * C), lambda i: (0, 0)),
            ],
            out_specs=(
                pl.BlockSpec((B, C), lambda i: (0, 0)),
                pl.BlockSpec((B, C), lambda i: (0, 0)),
                pl.BlockSpec((B, 1), lambda i: (0, 0)),
            ),
        ),
        cost_estimate=params_cost,
    )(cond, w, b)

    # ---- kernel 2: streaming affine over the (B*C, H*W) view ------------------------------
    budget = _vmem_budget_bytes()
    tr, thw = _select_tiles(rows, HW, x_item, budget)
    if row_tile is not None:
        tr = row_tile
    if hw_tile is not None:
        thw = hw_tile
    grid = (pl.cdiv(rows, tr), pl.cdiv(HW, thw))

    x_rows = x.reshape(rows, HW)
    s_rows = s_bc.reshape(rows, 1)                 # tiny XLA reshapes (B*C elements)
    off_rows = off_bc.reshape(rows, 1)

    affine_cost = pl.CostEstimate(
        flops=2 * rows * HW,
        transcendentals=0,
        bytes_accessed=2 * rows * HW * x_item + 2 * rows * p_item,
    )
    y_rows = pl.pallas_call(
        _affine_kernel,
        out_shape=jax.ShapeDtypeStruct((rows, HW), x.dtype),
        grid_spec=pltpu.PrefetchScalarGridSpec(
            num_scalar_prefetch=0,
            grid=grid,
            in_specs=[
                pl.BlockSpec((tr, 1), lambda r, h: (r, 0)),     # s   (per-row, resident per r)
                pl.BlockSpec((tr, 1), lambda r, h: (r, 0)),     # off
                pl.BlockSpec((tr, thw), lambda r, h: (r, h)),   # x
            ],
            out_specs=pl.BlockSpec((tr, thw), lambda r, h: (r, h)),
        ),
        compiler_params=pltpu.CompilerParams(
            dimension_semantics=("parallel", "parallel"),       # no carried state -> fully parallel
            vmem_limit_bytes=budget,
        ),
        cost_estimate=affine_cost,
    )(s_rows, off_rows, x_rows)

    y = y_rows.reshape(B, C, H, W)
    if logp is None:
        return y
    return y, logp - logdet
    # TODO(synk): inverse() of the PyTorch module is not ported (forward pass only).


# --------------------------------------------------------------------------------------
# Pure-JAX reference (mirrors the PyTorch code) + self-test
# --------------------------------------------------------------------------------------
def _reference_forward(x, cond, w, b, logp):
    B, C, H, W = x.shape
    if cond.ndim == 4:
        cond = cond[:, :, 0, 0]
    f = cond.reshape(B, -1) @ w + b[0]
    t = f[:, :C]
    s = f[:, C:]
    s = jax.nn.sigmoid(s) * 0.98 + 0.01
    t = jnp.broadcast_to(t.reshape(B, C, 1, 1), x.shape)
    s = jnp.broadcast_to(s.reshape(B, C, 1, 1), x.shape)
    s = jax.nn.sigmoid(s) * 0.98 + 0.01
    y = x * s + t * (1 - s)
    logdet = jnp.log(s).reshape(B, -1).sum(1, keepdims=True)
    return y, logp - logdet


if __name__ == "__main__":
    key = jax.random.PRNGKey(0)

    # ---- test 1: 4-D cond path, C a multiple of 4 (rows = 8), grid split on HW ----------
    k_x, k_c, k_w, k_b, k_lp = jax.random.split(key, 5)
    B, C, H, W, cond_dim = 2, 4, 16, 16, 8
    x = jax.random.normal(k_x, (B, C, H, W), dtype=jnp.float32)
    cond = jax.random.normal(k_c, (B, cond_dim, H, W), dtype=jnp.float32)
    logp = jax.random.normal(k_lp, (B, 1), dtype=jnp.float32)
    w = jax.random.normal(k_w, (cond_dim, 2 * C), dtype=jnp.float32) * 0.1
    b = jax.random.normal(k_b, (1, 2 * C), dtype=jnp.float32) * 0.1

    y, logpy = conditional_affine_forward(x, cond, w, b, logp=logp)
    jax.block_until_ready((y, logpy))
    y_ref, logpy_ref = _reference_forward(x, cond, w, b, logp)
    assert jnp.allclose(y, y_ref, atol=1e-5, rtol=1e-5), "y mismatch vs reference (test 1)"
    assert jnp.allclose(logpy, logpy_ref, atol=1e-4, rtol=1e-5), "logp mismatch vs reference (test 1)"

    # ---- test 2: 2-D cond, C not a multiple of 8 (rows = 10 -> partial row block) --------
    k_x2, k_c2, k_w2, k_b2, k_lp2 = jax.random.split(jax.random.PRNGKey(1), 5)
    B2, C2, H2, W2, D2 = 2, 5, 16, 16, 6
    x2 = jax.random.normal(k_x2, (B2, C2, H2, W2), dtype=jnp.float32)
    cond2 = jax.random.normal(k_c2, (B2, D2), dtype=jnp.float32)
    logp2 = jax.random.normal(k_lp2, (B2, 1), dtype=jnp.float32)
    w2 = jax.random.normal(k_w2, (D2, 2 * C2), dtype=jnp.float32) * 0.1
    b2 = jax.random.normal(k_b2, (1, 2 * C2), dtype=jnp.float32) * 0.1

    y2, logpy2 = conditional_affine_forward(x2, cond2, w2, b2, logp=logp2)
    jax.block_until_ready((y2, logpy2))
    y2_ref, logpy2_ref = _reference_forward(x2, cond2, w2, b2, logp2)
    assert jnp.allclose(y2, y2_ref, atol=1e-5, rtol=1e-5), "y mismatch vs reference (test 2)"
    assert jnp.allclose(logpy2, logpy2_ref, atol=1e-4, rtol=1e-5), "logp mismatch vs reference (test 2)"

    print("KERNEL_OK")
</pallas_src>

<mosaic_0001>
module attributes {stable_mosaic.version = 11 : i64} {
  func.func @_params_kernel(%arg0: i32, %arg1: memref<2x8xf32, #tpu.memory_space<vmem>>, %arg2: memref<8x8xf32, #tpu.memory_space<vmem>>, %arg3: memref<1x8xf32, #tpu.memory_space<vmem>>, %arg4: memref<2x4xf32, #tpu.memory_space<vmem>>, %arg5: memref<2x4xf32, #tpu.memory_space<vmem>>, %arg6: memref<2x1xf32, #tpu.memory_space<vmem>>) attributes {dimension_semantics = [#tpu.dimension_semantics<arbitrary>], iteration_bounds = array<i64: 1>, scalar_prefetch = 0 : i64, scratch_operands = 0 : i64, tpu.core_type = #tpu.core_type<tc>, window_params = [{pipeline_mode = #tpu.pipeline_mode<synchronous>, transform_indices = @transform_0, window_bounds = array<i64: 2, 8>}, {pipeline_mode = #tpu.pipeline_mode<synchronous>, transform_indices = @transform_1, window_bounds = array<i64: 8, 8>}, {pipeline_mode = #tpu.pipeline_mode<synchronous>, transform_indices = @transform_2, window_bounds = array<i64: 1, 8>}, {pipeline_mode = #tpu.pipeline_mode<synchronous>, transform_indices = @transform_3, window_bounds = array<i64: 2, 4>}, {pipeline_mode = #tpu.pipeline_mode<synchronous>, transform_indices = @transform_4, window_bounds = array<i64: 2, 4>}, {pipeline_mode = #tpu.pipeline_mode<synchronous>, transform_indices = @transform_5, window_bounds = array<i64: 2, 1>}]} {
    %c0 = arith.constant 0 : index
    %c0_0 = arith.constant 0 : index
    %0 = vector.load %arg1[%c0, %c0_0] : memref<2x8xf32, #tpu.memory_space<vmem>>, vector<2x8xf32>
    %c0_1 = arith.constant 0 : index
    %c0_2 = arith.constant 0 : index
    %1 = vector.load %arg2[%c0_1, %c0_2] : memref<8x8xf32, #tpu.memory_space<vmem>>, vector<8x8xf32>
    %cst = arith.constant dense<0.000000e+00> : vector<2x8xf32>
    %2 = tpu.matmul %0, %1, %cst {dimension_numbers = #tpu.dot_dimension_numbers<[1], [0], [0], [1], [0, 0, 1, 1], [], []>} : vector<2x8xf32>, vector<8x8xf32>, vector<2x8xf32> -> vector<2x8xf32>
    %c0_3 = arith.constant 0 : index
    %c0_4 = arith.constant 0 : index
    %3 = vector.load %arg3[%c0_3, %c0_4] : memref<1x8xf32, #tpu.memory_space<vmem>>, vector<1x8xf32>
    %4 = vector.broadcast %3 : vector<1x8xf32> to vector<2x8xf32>
    %5 = arith.addf %2, %4 : vector<2x8xf32>
    %6 = vector.extract_strided_slice %5 {offsets = [0, 0], sizes = [2, 4], strides = [1, 1]} : vector<2x8xf32> to vector<2x4xf32>
    %7 = vector.extract_strided_slice %5 {offsets = [0, 4], sizes = [2, 4], strides = [1, 1]} : vector<2x8xf32> to vector<2x4xf32>
    %8 = arith.negf %7 : vector<2x4xf32>
    %9 = math.exp %8 : vector<2x4xf32>
    %cst_5 = arith.constant 1.000000e+00 : f32
    %10 = vector.broadcast %cst_5 : f32 to vector<2x4xf32>
    %11 = arith.addf %10, %9 : vector<2x4xf32>
    %12 = arith.divf %10, %11 : vector<2x4xf32>
    %cst_6 = arith.constant 9.800000e-01 : f32
    %13 = vector.broadcast %cst_6 : f32 to vector<2x4xf32>
    %14 = arith.mulf %12, %13 : vector<2x4xf32>
    %cst_7 = arith.constant 0.00999999977 : f32
    %15 = vector.broadcast %cst_7 : f32 to vector<2x4xf32>
    %16 = arith.addf %14, %15 : vector<2x4xf32>
    %17 = arith.negf %16 : vector<2x4xf32>
    %18 = math.exp %17 : vector<2x4xf32>
    %cst_8 = arith.constant 1.000000e+00 : f32
    %19 = vector.broadcast %cst_8 : f32 to vector<2x4xf32>
    %20 = arith.addf %19, %18 : vector<2x4xf32>
    %21 = arith.divf %19, %20 : vector<2x4xf32>
    %cst_9 = arith.constant 9.800000e-01 : f32
    %22 = vector.broadcast %cst_9 : f32 to vector<2x4xf32>
    %23 = arith.mulf %21, %22 : vector<2x4xf32>
    %cst_10 = arith.constant 0.00999999977 : f32
    %24 = vector.broadcast %cst_10 : f32 to vector<2x4xf32>
    %25 = arith.addf %23, %24 : vector<2x4xf32>
    %c0_11 = arith.constant 0 : index
    %c0_12 = arith.constant 0 : index
    %26 = vector.load %arg4[%c0_11, %c0_12] : memref<2x4xf32, #tpu.memory_space<vmem>>, vector<2x4xf32>
    tpu.vector_store %arg4[%c0_11, %c0_12], %25 {strides = array<i32>} : memref<2x4xf32, #tpu.memory_space<vmem>>, vector<2x4xf32>,
    %cst_13 = arith.constant 1.000000e+00 : f32
    %27 = vector.broadcast %cst_13 : f32 to vector<2x4xf32>
    %28 = arith.subf %27, %25 : vector<2x4xf32>
    %29 = arith.mulf %6, %28 : vector<2x4xf32>
    %c0_14 = arith.constant 0 : index
    %c0_15 = arith.constant 0 : index
    %30 = vector.load %arg5[%c0_14, %c0_15] : memref<2x4xf32, #tpu.memory_space<vmem>>, vector<2x4xf32>
    tpu.vector_store %arg5[%c0_14, %c0_15], %29 {strides = array<i32>} : memref<2x4xf32, #tpu.memory_space<vmem>>, vector<2x4xf32>,
    %31 = math.log %25 : vector<2x4xf32>
    %cst_16 = arith.constant dense<0.000000e+00> : vector<2xf32>
    %32 = vector.multi_reduction <add>, %31, %cst_16 [1] : vector<2x4xf32> to vector<2xf32>
    %33 = vector.shape_cast %32 : vector<2xf32> to vector<2x1xf32>
    %cst_17 = arith.constant 2.560000e+02 : f32
    %34 = vector.broadcast %cst_17 : f32 to vector<2x1xf32>
    %35 = arith.mulf %33, %34 : vector<2x1xf32>
    %c0_18 = arith.constant 0 : index
    %c0_19 = arith.constant 0 : index
    %36 = vector.load %arg6[%c0_18, %c0_19] : memref<2x1xf32, #tpu.memory_space<vmem>>, vector<2x1xf32>
    tpu.vector_store %arg6[%c0_18, %c0_19], %35 {strides = array<i32>} : memref<2x1xf32, #tpu.memory_space<vmem>>, vector<2x1xf32>,
    return
  }
  func.func @transform_0(%arg0: i32) -> (i32, i32) {
    %c0_i32 = arith.constant 0 : i32
    %c0_i32_0 = arith.constant 0 : i32
    %c0_i32_1 = arith.constant 0 : i32
    return %c0_i32, %c0_i32_0 : i32, i32
  }
  func.func @transform_1(%arg0: i32) -> (i32, i32) {
    %c0_i32 = arith.constant 0 : i32
    %c0_i32_0 = arith.constant 0 : i32
    %c0_i32_1 = arith.constant 0 : i32
    return %c0_i32, %c0_i32_0 : i32, i32
  }
  func.func @transform_2(%arg0: i32) -> (i32, i32) {
    %c0_i32 = arith.constant 0 : i32
    %c0_i32_0 = arith.constant 0 : i32
    %c0_i32_1 = arith.constant 0 : i32
    return %c0_i32, %c0_i32_0 : i32, i32
  }
  func.func @transform_3(%arg0: i32) -> (i32, i32) {
    %c0_i32 = arith.constant 0 : i32
    %c0_i32_0 = arith.constant 0 : i32
    %c0_i32_1 = arith.constant 0 : i32
    return %c0_i32, %c0_i32_0 : i32, i32
  }
  func.func @transform_4(%arg0: i32) -> (i32, i32) {
    %c0_i32 = arith.constant 0 : i32
    %c0_i32_0 = arith.constant 0 : i32
    %c0_i32_1 = arith.constant 0 : i32
    return %c0_i32, %c0_i32_0 : i32, i32
  }
  func.func @transform_5(%arg0: i32) -> (i32, i32) {
    %c0_i32 = arith.constant 0 : i32
    %c0_i32_0 = arith.constant 0 : i32
    %c0_i32_1 = arith.constant 0 : i32
    return %c0_i32, %c0_i32_0 : i32, i32
  }
}

</mosaic_0001>

<llo_original>
// kernel: tpu_custom_call.1
$region0: #{tpu_custom_call.1}
  #allocation0 [shape = 'u32[]', space=smem, size = 0x4, offset = 0x4, fixed_abs, tag = 'smem constant byte address 0x4 - core index']
  #allocation1 [shape = 'u32[72,128]{1,0:T(1,128)}', space=vmem, size = 0x9000, scoped, tag = 'internal scratch']
  %s0 = inlined_call_operand.hbm [shape: f32[2,8], index: 0, kind: input, shape index: {}]
  %s1 = inlined_call_operand.hbm [shape: f32[8,8], index: 1, kind: input, shape index: {}]
  %s2 = inlined_call_operand.vmem [shape: f32[1,8], index: 2, kind: input, shape index: {}]
  %s3 = inlined_call_operand.hbm [shape: f32[2,4], index: 3, kind: output, shape index: {0}]
  %s4 = inlined_call_operand.hbm [shape: f32[2,4], index: 4, kind: output, shape index: {1}]
  %s5 = inlined_call_operand.vmem [shape: f32[2,1], index: 5, kind: output, shape index: {2}]
  %6 = xla_tuple %s3, %s4, %s5
  %s7 = sld [smem:[#allocation0]]
  $region46: #{tpu_custom_call.1} parent=0
    _
  %s9 = ssub.s32 1, %s7
  %s10 = scalar_select 0, %s9, %s7
  $region1: #{tpu_custom_call.1} parent=0
    #allocation2 [shape = 'u8[1024]{0}', space=vmem, size = 0x400, scoped, tag = 'input window, operand 0, single buffered']
    #allocation3 [shape = 's32[1]{0}', space=sflag, size = 0x4, scoped, tag = 'scoped memory for tpu_custom_call.1']
    #allocation4 [shape = 's32[1]{0}', space=sflag, size = 0x4, scoped, tag = 'scoped memory for tpu_custom_call.1']
    #allocation5 [shape = 'u8[4096]{0}', space=vmem, size = 0x1000, scoped, tag = 'input window, operand 1, single buffered']
    #allocation6 [shape = 's32[1]{0}', space=sflag, size = 0x4, scoped, tag = 'scoped memory for tpu_custom_call.1']
    #allocation7 [shape = 'u8[1024]{0}', space=vmem, size = 0x400, scoped, tag = 'output window, operand 0, single buffered']
    #allocation8 [shape = 'u8[1024]{0}', space=vmem, size = 0x400, scoped, tag = 'output window, operand 1, single buffered']
    #allocation9 [shape = 's32[1]{0}', space=sflag, size = 0x4, scoped, tag = 'scoped memory for tpu_custom_call.1']
    %11 = vsyncpa [#allocation3], 0
    %12 = vsyncpa [#allocation6], 0
    %13 = vsyncpa [#allocation4], 0
    %14 = vsyncpa [#allocation9], 0
    // Predicated region
    $region2: #{tpu_custom_call.1} parent=1 // pred_check
      _
    $region3: #{tpu_custom_call.1} parent=1 // pred_check_branch
      %16 = sbr.rel (0) target = $region5
    $region4: #{tpu_custom_call.1} parent=1 // pred_region
      %18 = vsyncadd [#allocation3], 0
      %s20 = sshll.u32 %s0, 4
      %s21 = int_to_ptr.hbm [resolvable:$true] %s20
      %s22 = sshll.u32 [#allocation2], 4
      %s23 = int_to_ptr.vmem [resolvable:$true] %s22
      %25 = dma.hbm_to_vmem [thread:$0]  %s21, 32, %s23, [#allocation3]
    $region5: #{tpu_custom_call.1} parent=1 // pred_fallthru
      _
    // Predicated region
    $region6: #{tpu_custom_call.1} parent=1 // pred_check
      _
    $region7: #{tpu_custom_call.1} parent=1 // pred_check_branch
      %27 = sbr.rel (0) target = $region9
    $region8: #{tpu_custom_call.1} parent=1 // pred_region
      %29 = vsyncadd [#allocation6], 0
      %s31 = sshll.u32 %s1, 4
      %s32 = int_to_ptr.hbm [resolvable:$true] %s31
      %s33 = sshll.u32 [#allocation5], 4
      %s34 = int_to_ptr.vmem [resolvable:$true] %s33
      %36 = dma.hbm_to_vmem [thread:$0]  %s32, 128, %s34, [#allocation6]
    $region9: #{tpu_custom_call.1} parent=1 // pred_fallthru
      _
    // Predicated region
    $region10: #{tpu_custom_call.1} parent=1 // pred_check
      _
    $region11: #{tpu_custom_call.1} parent=1 // pred_check_branch
      %38 = sbr.rel (0) target = $region13
    $region12: #{tpu_custom_call.1} parent=1 // pred_region
      _
    $region13: #{tpu_custom_call.1} parent=1 // pred_fallthru
      _
    // Predicated region
    $region14: #{tpu_custom_call.1} parent=1 // pred_check
      _
    $region15: #{tpu_custom_call.1} parent=1 // pred_check_branch
      %40 = sbr.rel (0) target = $region17
    $region16: #{tpu_custom_call.1} parent=1 // pred_region
      %42 = dma.done [#allocation3], 32
    $region17: #{tpu_custom_call.1} parent=1 // pred_fallthru
      _
    // Predicated region
    $region18: #{tpu_custom_call.1} parent=1 // pred_check
      _
    $region19: #{tpu_custom_call.1} parent=1 // pred_check_branch
      %44 = sbr.rel (0) target = $region21
    $region20: #{tpu_custom_call.1} parent=1 // pred_region
      %46 = dma.done [#allocation6], 128
    $region21: #{tpu_custom_call.1} parent=1 // pred_fallthru
      _
    %v47 = vld [vmem:[#allocation2] sm:$0x3]
    %v48 = vld [vmem:[#allocation5] sm:$0xff]
    %v49 = vld [vmem:[%s2] sm:$0x1]
    %v51 = vperm.slane %v49, 0
    %vm53 = vcmask 64512
    %v55 = vsel %vm53, %v47, 0
    %57 = vmatpush.msra.mxu0 0.0
    %58 = vmatpush.msra.mxu0 0.0
    %59 = vmatpush.msra.mxu0 0.0
    %60 = vmatpush.msra.mxu0 0.0
    %61 = vmatpush.msra.mxu0 0.0
    %62 = vmatpush.msra.mxu0 0.0
    %63 = vmatpush.msra.mxu0 0.0
    %64 = vmatpush.msra.mxu0 0.0
    %65 = vmatpush.msra.mxu0 0.0
    %66 = vmatpush.msra.mxu0 0.0
    %67 = vmatpush.msra.mxu0 0.0
    %68 = vmatpush.msra.mxu0 0.0
    %69 = vmatpush.msra.mxu0 0.0
    %70 = vmatpush.msra.mxu0 0.0
    %71 = vmatpush.msra.mxu0 0.0
    %72 = vmatpush.msra.mxu0 %v48
    %73 = vmatmul.f32.gmra.mxu0 %v55
    %v74 = vpop.f32.mrf.mxu0
    %v75 = vadd.f32 %v51, %v74
    %76 = vdwg.mxu0
    %v77 = vxor.u32 %v75, 2147483648
    %v78 = vmul.f32 %v77, 1.442695
    %v79 = vpow.pop %v78
    %v80 = vadd.f32 %v79, 1.0
    %v81 = vrcp.pop %v80
    %v82 = vmul.f32 %v80, %v81
    %v83 = vsub.f32 1.0, %v82
    %v84 = vmul.f32 %v81, %v83
    %v85 = vadd.f32 %v81, %v84
    %vm86 = vweird.f32 %v80
    %vm87 = vweird.f32 %v81
    %vm88 = vmor %vm86, %vm87
    %v89 = vsel %vm88, %v81, %v85
    %v90 = vand.u32 2147483647, %v80
    %vm91 = vcmp.eq.f32.partialorder %v90, 8.507059e+37
    %v92 = vand.u32 %v80, 2147483648
    %v93 = vor.u32 1.1754944e-38, %v92
    %v94 = vsel %vm91, %v93, %v89
    %v95 = vmul.f32 1.0, %v94
    %v96 = vmul.f32 %v95, 0.98
    %v97 = vadd.f32 %v96, 0.01
    %v98 = vxor.u32 %v97, 2147483648
    %v99 = vmul.f32 %v98, 1.442695
    %v100 = vpow.pop %v99
    %v101 = vadd.f32 %v100, 1.0
    %v102 = vrcp.pop %v101
    %v103 = vmul.f32 %v101, %v102
    %v104 = vsub.f32 1.0, %v103
    %v105 = vmul.f32 %v102, %v104
    %v106 = vadd.f32 %v102, %v105
    %vm107 = vweird.f32 %v101
    %vm108 = vweird.f32 %v102
    %vm109 = vmor %vm107, %vm108
    %v110 = vsel %vm109, %v102, %v106
    %v111 = vand.u32 2147483647, %v101
    %vm112 = vcmp.eq.f32.partialorder %v111, 8.507059e+37
    %v113 = vand.u32 %v101, 2147483648
    %v114 = vor.u32 1.1754944e-38, %v113
    %v115 = vsel %vm112, %v114, %v110
    %v116 = vmul.f32 1.0, %v115
    %v117 = vmul.f32 %v116, 0.98
    %v118 = vadd.f32 %v117, 0.01
    %120 = vrot.lane.b32.xlu0 %v118, 124
    %v121 = vpop.permute.xlu0 %120
    %vm123 = vcmask 25600
    %124 = vst.msk [vmem:[#allocation7] sm:$0x3] %vm123, %v121
    %v125 = vsub.f32 1.0, %v118
    %127 = vrot.lane.b32.xlu0 %v125, 124
    %v128 = vpop.permute.xlu0 %127
    %v130 = vmul.f32 %v75, %v128
    %131 = vst.msk [vmem:[#allocation8] sm:$0x3] %vm123, %v130
    %v132 = vlog2.pop %v118
    %v133 = vmul.f32 %v132, 0.6931472
    %135 = vrot.lane.b32.xlu0 %v133, 124
    %v136 = vpop.permute.xlu0 %135
    %v138 = vsel %vm123, %v136, 0.0
    %139 = vadd.xlane.f32.xlu0 %v138
    %v140 = vpop.xlane.xlu0 %139
    %v141 = vmul.f32 %v140, 256.0
    %vm142 = vcmask 1024
    %143 = vst.msk [vmem:[%s5] sm:$0x3] %vm142, %v141
    // Predicated region
    $region22: #{tpu_custom_call.1} parent=1 // pred_check
      _
    $region23: #{tpu_custom_call.1} parent=1 // pred_check_branch
      %145 = sbr.rel (0) target = $region25
    $region24: #{tpu_custom_call.1} parent=1 // pred_region
      %147 = vsyncadd [#allocation4], 0
      %s149 = sshll.u32 [#allocation7], 4
      %s150 = int_to_ptr.vmem [resolvable:$true] %s149
      %s151 = sshll.u32 %s3, 4
      %s152 = int_to_ptr.hbm [resolvable:$true] %s151
      %154 = dma.vmem_to_hbm [thread:$0]  %s150, 32, %s152, [#allocation4]
    $region25: #{tpu_custom_call.1} parent=1 // pred_fallthru
      _
    // Predicated region
    $region26: #{tpu_custom_call.1} parent=1 // pred_check
      _
    $region27: #{tpu_custom_call.1} parent=1 // pred_check_branch
      %156 = sbr.rel (0) target = $region29
    $region28: #{tpu_custom_call.1} parent=1 // pred_region
      %158 = vsyncadd [#allocation9], 0
      %s160 = sshll.u32 [#allocation8], 4
      %s161 = int_to_ptr.vmem [resolvable:$true] %s160
      %s162 = sshll.u32 %s4, 4
      %s163 = int_to_ptr.hbm [resolvable:$true] %s162
      %165 = dma.vmem_to_hbm [thread:$0]  %s161, 32, %s163, [#allocation9]
    $region29: #{tpu_custom_call.1} parent=1 // pred_fallthru
      _
    // Predicated region
    $region30: #{tpu_custom_call.1} parent=1 // pred_check
      _
    $region31: #{tpu_custom_call.1} parent=1 // pred_check_branch
      %167 = sbr.rel (0) target = $region33
    $region32: #{tpu_custom_call.1} parent=1 // pred_region
      _
    $region33: #{tpu_custom_call.1} parent=1 // pred_fallthru
      _
    // Predicated region
    $region34: #{tpu_custom_call.1} parent=1 // pred_check
      _
    $region35: #{tpu_custom_call.1} parent=1 // pred_check_branch
      %169 = sbr.rel (0) target = $region37
    $region36: #{tpu_custom_call.1} parent=1 // pred_region
      %171 = dma.done [#allocation4], 32
    $region37: #{tpu_custom_call.1} parent=1 // pred_fallthru
      _
    // Predicated region
    $region38: #{tpu_custom_call.1} parent=1 // pred_check
      _
    $region39: #{tpu_custom_call.1} parent=1 // pred_check_branch
      %173 = sbr.rel (0) target = $region41
    $region40: #{tpu_custom_call.1} parent=1 // pred_region
      %175 = dma.done [#allocation9], 32
    $region41: #{tpu_custom_call.1} parent=1 // pred_fallthru
      _
    // Predicated region
    $region42: #{tpu_custom_call.1} parent=1 // pred_check
      _
    $region43: #{tpu_custom_call.1} parent=1 // pred_check_branch
      %177 = sbr.rel (0) target = $region45
    $region44: #{tpu_custom_call.1} parent=1 // pred_region
      _
    $region45: #{tpu_custom_call.1} parent=1 // pred_fallthru
      _
    %178 = vsyncpa [#allocation3], 1
    %179 = vsyncpa [#allocation6], 1
    %180 = vsyncpa [#allocation4], 1
    %181 = vsyncpa [#allocation9], 1

</llo_original>
